<compile_context>
chip_gen: v7x
topology: tpu7x:2x2x1
jax: 0.10.0
libtpu: 0.0.40
codegen_flags: <defaults>
</compile_context>

<pallas_src>
import jax
import jax.numpy as jnp
from jax.experimental import pallas as pl
from jax.experimental.pallas import tpu as pltpu


def _make_hbm_copy_kernel(n_chunks: int):
    """Kernel: direct HBM->HBM DMA of the whole array in `n_chunks` pieces."""

    def kernel(x_hbm, o_hbm, sem):
        # Start every chunk's DMA first (overlap issue latency), then wait.
        copies = []
        for c in range(n_chunks):
            cp = pltpu.make_async_copy(x_hbm.at[c], o_hbm.at[c], sem.at[c])
            cp.start()
            copies.append(cp)
        for cp in copies:
            cp.wait()

    return kernel


def _pallas_copy(x: jax.Array) -> jax.Array:
    """Materialize a copy of x via a single-shot HBM->HBM DMA pallas_call."""
    orig_shape = x.shape
    total = x.size

    # Up to 4 contiguous chunks to overlap DMA issue latency; fall back to a
    # single whole-array DMA when the element count doesn't divide evenly.
    n_chunks = 1
    for c in (4, 2):
        if total % c == 0:
            n_chunks = c
            break

    x_flat = x.reshape((n_chunks, total // n_chunks))

    out_flat = pl.pallas_call(
        _make_hbm_copy_kernel(n_chunks),
        out_shape=jax.ShapeDtypeStruct(x_flat.shape, x_flat.dtype),
        in_specs=[pl.BlockSpec(memory_space=pl.ANY)],    # raw HBM ref, no auto-DMA
        out_specs=pl.BlockSpec(memory_space=pl.ANY),     # raw HBM ref, DMA target
        scratch_shapes=[pltpu.SemaphoreType.DMA((n_chunks,))],
    )(x_flat)
    return out_flat.reshape(orig_shape)


def identity(x: jax.Array, *, force_pallas: bool = False) -> jax.Array:
    """Identity: returns x. With force_pallas=True, materializes a DMA copy."""
    # Optimal Identity is no kernel at all, for every size (zero HBM traffic,
    # zero launch overhead).  The Pallas path exists only for demonstration /
    # when an explicit fresh buffer is wanted.
    if not force_pallas or x.size == 0:
        return x
    return _pallas_copy(x)


if __name__ == "__main__":
    key = jax.random.PRNGKey(0)
    # Small NCHW input consistent with a feature-extractor pass-through.
    x = jax.random.normal(key, (2, 4, 16, 16), dtype=jnp.float32)

    # Exercise the Pallas HBM->HBM DMA path explicitly once.
    y = identity(x, force_pallas=True)
    jax.block_until_ready(y)
    assert y.shape == x.shape and y.dtype == x.dtype
    assert bool(jnp.all(y == x))

    # Default path: pure pass-through, no kernel launch, no copy.
    y_fast = identity(x)
    jax.block_until_ready(y_fast)
    assert y_fast.shape == x.shape and y_fast.dtype == x.dtype
    assert bool(jnp.all(y_fast == x))

    print("KERNEL_OK")
</pallas_src>

<mosaic_0001>
module attributes {stable_mosaic.version = 11 : i64} {
  func.func @kernel(%arg0: memref<4x512xf32, #tpu.memory_space<any>>, %arg1: memref<4x512xf32, #tpu.memory_space<any>>, %arg2: memref<4x!tpu.dma_semaphore, #tpu.memory_space<semaphore_mem>>) attributes {dimension_semantics = [], scalar_prefetch = 0 : i64, scratch_operands = 1 : i64, tpu.core_type = #tpu.core_type<tc>} {
    %c0_i32 = arith.constant 0 : i32
    %c0_i32_0 = arith.constant 0 : i32
    %c0_i32_1 = arith.constant 0 : i32
    %c0_i32_2 = arith.constant 0 : i32
    %0 = tpu.memref_slice %arg0[%c0_i32, %c0_i32_2] : memref<4x512xf32, #tpu.memory_space<any>> -> memref<1x512xf32, #tpu.memory_space<any>>
    %1 = tpu.memref_squeeze %0 : memref<1x512xf32, #tpu.memory_space<any>> -> memref<512xf32, #tpu.memory_space<any>>
    %c0_i32_3 = arith.constant 0 : i32
    %2 = tpu.memref_slice %arg1[%c0_i32_0, %c0_i32_3] : memref<4x512xf32, #tpu.memory_space<any>> -> memref<1x512xf32, #tpu.memory_space<any>>
    %3 = tpu.memref_squeeze %2 : memref<1x512xf32, #tpu.memory_space<any>> -> memref<512xf32, #tpu.memory_space<any>>
    %4 = tpu.memref_slice %arg2[%c0_i32_1] : memref<4x!tpu.dma_semaphore, #tpu.memory_space<semaphore_mem>> -> memref<1x!tpu.dma_semaphore, #tpu.memory_space<semaphore_mem>>
    %5 = tpu.memref_squeeze %4 : memref<1x!tpu.dma_semaphore, #tpu.memory_space<semaphore_mem>> -> memref<!tpu.dma_semaphore, #tpu.memory_space<semaphore_mem>>
    tpu.enqueue_dma source(%1 : memref<512xf32, #tpu.memory_space<any>>) target(%3 : memref<512xf32, #tpu.memory_space<any>>) target_semaphore(%5 : memref<!tpu.dma_semaphore, #tpu.memory_space<semaphore_mem>>)
    %c1_i32 = arith.constant 1 : i32
    %c1_i32_4 = arith.constant 1 : i32
    %c1_i32_5 = arith.constant 1 : i32
    %c0_i32_6 = arith.constant 0 : i32
    %6 = tpu.memref_slice %arg0[%c1_i32, %c0_i32_6] : memref<4x512xf32, #tpu.memory_space<any>> -> memref<1x512xf32, #tpu.memory_space<any>>
    %7 = tpu.memref_squeeze %6 : memref<1x512xf32, #tpu.memory_space<any>> -> memref<512xf32, #tpu.memory_space<any>>
    %c0_i32_7 = arith.constant 0 : i32
    %8 = tpu.memref_slice %arg1[%c1_i32_4, %c0_i32_7] : memref<4x512xf32, #tpu.memory_space<any>> -> memref<1x512xf32, #tpu.memory_space<any>>
    %9 = tpu.memref_squeeze %8 : memref<1x512xf32, #tpu.memory_space<any>> -> memref<512xf32, #tpu.memory_space<any>>
    %10 = tpu.memref_slice %arg2[%c1_i32_5] : memref<4x!tpu.dma_semaphore, #tpu.memory_space<semaphore_mem>> -> memref<1x!tpu.dma_semaphore, #tpu.memory_space<semaphore_mem>>
    %11 = tpu.memref_squeeze %10 : memref<1x!tpu.dma_semaphore, #tpu.memory_space<semaphore_mem>> -> memref<!tpu.dma_semaphore, #tpu.memory_space<semaphore_mem>>
    tpu.enqueue_dma source(%7 : memref<512xf32, #tpu.memory_space<any>>) target(%9 : memref<512xf32, #tpu.memory_space<any>>) target_semaphore(%11 : memref<!tpu.dma_semaphore, #tpu.memory_space<semaphore_mem>>)
    %c2_i32 = arith.constant 2 : i32
    %c2_i32_8 = arith.constant 2 : i32
    %c2_i32_9 = arith.constant 2 : i32
    %c0_i32_10 = arith.constant 0 : i32
    %12 = tpu.memref_slice %arg0[%c2_i32, %c0_i32_10] : memref<4x512xf32, #tpu.memory_space<any>> -> memref<1x512xf32, #tpu.memory_space<any>>
    %13 = tpu.memref_squeeze %12 : memref<1x512xf32, #tpu.memory_space<any>> -> memref<512xf32, #tpu.memory_space<any>>
    %c0_i32_11 = arith.constant 0 : i32
    %14 = tpu.memref_slice %arg1[%c2_i32_8, %c0_i32_11] : memref<4x512xf32, #tpu.memory_space<any>> -> memref<1x512xf32, #tpu.memory_space<any>>
    %15 = tpu.memref_squeeze %14 : memref<1x512xf32, #tpu.memory_space<any>> -> memref<512xf32, #tpu.memory_space<any>>
    %16 = tpu.memref_slice %arg2[%c2_i32_9] : memref<4x!tpu.dma_semaphore, #tpu.memory_space<semaphore_mem>> -> memref<1x!tpu.dma_semaphore, #tpu.memory_space<semaphore_mem>>
    %17 = tpu.memref_squeeze %16 : memref<1x!tpu.dma_semaphore, #tpu.memory_space<semaphore_mem>> -> memref<!tpu.dma_semaphore, #tpu.memory_space<semaphore_mem>>
    tpu.enqueue_dma source(%13 : memref<512xf32, #tpu.memory_space<any>>) target(%15 : memref<512xf32, #tpu.memory_space<any>>) target_semaphore(%17 : memref<!tpu.dma_semaphore, #tpu.memory_space<semaphore_mem>>)
    %c3_i32 = arith.constant 3 : i32
    %c3_i32_12 = arith.constant 3 : i32
    %c3_i32_13 = arith.constant 3 : i32
    %c0_i32_14 = arith.constant 0 : i32
    %18 = tpu.memref_slice %arg0[%c3_i32, %c0_i32_14] : memref<4x512xf32, #tpu.memory_space<any>> -> memref<1x512xf32, #tpu.memory_space<any>>
    %19 = tpu.memref_squeeze %18 : memref<1x512xf32, #tpu.memory_space<any>> -> memref<512xf32, #tpu.memory_space<any>>
    %c0_i32_15 = arith.constant 0 : i32
    %20 = tpu.memref_slice %arg1[%c3_i32_12, %c0_i32_15] : memref<4x512xf32, #tpu.memory_space<any>> -> memref<1x512xf32, #tpu.memory_space<any>>
    %21 = tpu.memref_squeeze %20 : memref<1x512xf32, #tpu.memory_space<any>> -> memref<512xf32, #tpu.memory_space<any>>
    %22 = tpu.memref_slice %arg2[%c3_i32_13] : memref<4x!tpu.dma_semaphore, #tpu.memory_space<semaphore_mem>> -> memref<1x!tpu.dma_semaphore, #tpu.memory_space<semaphore_mem>>
    %23 = tpu.memref_squeeze %22 : memref<1x!tpu.dma_semaphore, #tpu.memory_space<semaphore_mem>> -> memref<!tpu.dma_semaphore, #tpu.memory_space<semaphore_mem>>
    tpu.enqueue_dma source(%19 : memref<512xf32, #tpu.memory_space<any>>) target(%21 : memref<512xf32, #tpu.memory_space<any>>) target_semaphore(%23 : memref<!tpu.dma_semaphore, #tpu.memory_space<semaphore_mem>>)
    %c0_i32_16 = arith.constant 0 : i32
    %c0_i32_17 = arith.constant 0 : i32
    %c0_i32_18 = arith.constant 0 : i32
    %c0_i32_19 = arith.constant 0 : i32
    %24 = tpu.memref_slice %arg0[%c0_i32_16, %c0_i32_19] : memref<4x512xf32, #tpu.memory_space<any>> -> memref<1x512xf32, #tpu.memory_space<any>>
    %25 = tpu.memref_squeeze %24 : memref<1x512xf32, #tpu.memory_space<any>> -> memref<512xf32, #tpu.memory_space<any>>
    %c0_i32_20 = arith.constant 0 : i32
    %26 = tpu.memref_slice %arg1[%c0_i32_17, %c0_i32_20] : memref<4x512xf32, #tpu.memory_space<any>> -> memref<1x512xf32, #tpu.memory_space<any>>
    %27 = tpu.memref_squeeze %26 : memref<1x512xf32, #tpu.memory_space<any>> -> memref<512xf32, #tpu.memory_space<any>>
    %28 = tpu.memref_slice %arg2[%c0_i32_18] : memref<4x!tpu.dma_semaphore, #tpu.memory_space<semaphore_mem>> -> memref<1x!tpu.dma_semaphore, #tpu.memory_space<semaphore_mem>>
    %29 = tpu.memref_squeeze %28 : memref<1x!tpu.dma_semaphore, #tpu.memory_space<semaphore_mem>> -> memref<!tpu.dma_semaphore, #tpu.memory_space<semaphore_mem>>
    tpu.wait_dma2 semaphore(%29 : memref<!tpu.dma_semaphore, #tpu.memory_space<semaphore_mem>>) src(%25 : memref<512xf32, #tpu.memory_space<any>>) dst(%27 : memref<512xf32, #tpu.memory_space<any>>)
    %c1_i32_21 = arith.constant 1 : i32
    %c1_i32_22 = arith.constant 1 : i32
    %c1_i32_23 = arith.constant 1 : i32
    %c0_i32_24 = arith.constant 0 : i32
    %30 = tpu.memref_slice %arg0[%c1_i32_21, %c0_i32_24] : memref<4x512xf32, #tpu.memory_space<any>> -> memref<1x512xf32, #tpu.memory_space<any>>
    %31 = tpu.memref_squeeze %30 : memref<1x512xf32, #tpu.memory_space<any>> -> memref<512xf32, #tpu.memory_space<any>>
    %c0_i32_25 = arith.constant 0 : i32
    %32 = tpu.memref_slice %arg1[%c1_i32_22, %c0_i32_25] : memref<4x512xf32, #tpu.memory_space<any>> -> memref<1x512xf32, #tpu.memory_space<any>>
    %33 = tpu.memref_squeeze %32 : memref<1x512xf32, #tpu.memory_space<any>> -> memref<512xf32, #tpu.memory_space<any>>
    %34 = tpu.memref_slice %arg2[%c1_i32_23] : memref<4x!tpu.dma_semaphore, #tpu.memory_space<semaphore_mem>> -> memref<1x!tpu.dma_semaphore, #tpu.memory_space<semaphore_mem>>
    %35 = tpu.memref_squeeze %34 : memref<1x!tpu.dma_semaphore, #tpu.memory_space<semaphore_mem>> -> memref<!tpu.dma_semaphore, #tpu.memory_space<semaphore_mem>>
    tpu.wait_dma2 semaphore(%35 : memref<!tpu.dma_semaphore, #tpu.memory_space<semaphore_mem>>) src(%31 : memref<512xf32, #tpu.memory_space<any>>) dst(%33 : memref<512xf32, #tpu.memory_space<any>>)
    %c2_i32_26 = arith.constant 2 : i32
    %c2_i32_27 = arith.constant 2 : i32
    %c2_i32_28 = arith.constant 2 : i32
    %c0_i32_29 = arith.constant 0 : i32
    %36 = tpu.memref_slice %arg0[%c2_i32_26, %c0_i32_29] : memref<4x512xf32, #tpu.memory_space<any>> -> memref<1x512xf32, #tpu.memory_space<any>>
    %37 = tpu.memref_squeeze %36 : memref<1x512xf32, #tpu.memory_space<any>> -> memref<512xf32, #tpu.memory_space<any>>
    %c0_i32_30 = arith.constant 0 : i32
    %38 = tpu.memref_slice %arg1[%c2_i32_27, %c0_i32_30] : memref<4x512xf32, #tpu.memory_space<any>> -> memref<1x512xf32, #tpu.memory_space<any>>
    %39 = tpu.memref_squeeze %38 : memref<1x512xf32, #tpu.memory_space<any>> -> memref<512xf32, #tpu.memory_space<any>>
    %40 = tpu.memref_slice %arg2[%c2_i32_28] : memref<4x!tpu.dma_semaphore, #tpu.memory_space<semaphore_mem>> -> memref<1x!tpu.dma_semaphore, #tpu.memory_space<semaphore_mem>>
    %41 = tpu.memref_squeeze %40 : memref<1x!tpu.dma_semaphore, #tpu.memory_space<semaphore_mem>> -> memref<!tpu.dma_semaphore, #tpu.memory_space<semaphore_mem>>
    tpu.wait_dma2 semaphore(%41 : memref<!tpu.dma_semaphore, #tpu.memory_space<semaphore_mem>>) src(%37 : memref<512xf32, #tpu.memory_space<any>>) dst(%39 : memref<512xf32, #tpu.memory_space<any>>)
    %c3_i32_31 = arith.constant 3 : i32
    %c3_i32_32 = arith.constant 3 : i32
    %c3_i32_33 = arith.constant 3 : i32
    %c0_i32_34 = arith.constant 0 : i32
    %42 = tpu.memref_slice %arg0[%c3_i32_31, %c0_i32_34] : memref<4x512xf32, #tpu.memory_space<any>> -> memref<1x512xf32, #tpu.memory_space<any>>
    %43 = tpu.memref_squeeze %42 : memref<1x512xf32, #tpu.memory_space<any>> -> memref<512xf32, #tpu.memory_space<any>>
    %c0_i32_35 = arith.constant 0 : i32
    %44 = tpu.memref_slice %arg1[%c3_i32_32, %c0_i32_35] : memref<4x512xf32, #tpu.memory_space<any>> -> memref<1x512xf32, #tpu.memory_space<any>>
    %45 = tpu.memref_squeeze %44 : memref<1x512xf32, #tpu.memory_space<any>> -> memref<512xf32, #tpu.memory_space<any>>
    %46 = tpu.memref_slice %arg2[%c3_i32_33] : memref<4x!tpu.dma_semaphore, #tpu.memory_space<semaphore_mem>> -> memref<1x!tpu.dma_semaphore, #tpu.memory_space<semaphore_mem>>
    %47 = tpu.memref_squeeze %46 : memref<1x!tpu.dma_semaphore, #tpu.memory_space<semaphore_mem>> -> memref<!tpu.dma_semaphore, #tpu.memory_space<semaphore_mem>>
    tpu.wait_dma2 semaphore(%47 : memref<!tpu.dma_semaphore, #tpu.memory_space<semaphore_mem>>) src(%43 : memref<512xf32, #tpu.memory_space<any>>) dst(%45 : memref<512xf32, #tpu.memory_space<any>>)
    return
  }
}

</mosaic_0001>

<llo_original>
// kernel: tpu_custom_call.1
$region0: #{tpu_custom_call.1}
  #allocation0 [shape = 'u32[]', space=smem, size = 0x4, offset = 0x4, fixed_abs, tag = 'smem constant byte address 0x4 - core index']
  #allocation1 [shape = 'u32[144,128]{1,0:T(1,128)}', space=vmem, size = 0x12000, scoped, tag = 'internal scratch']
  #allocation2 [shape = 's32[4]{0}', space=sflag, size = 0x10, scoped, tag = 'scratch operand']
  #allocation3 [shape = 's32[]', space=sflag, size = 0x4, offset = 0, fixed_abs, tag = 'sflag constant byte address 0x0 - dummy sync flag']
  #allocation5 [shape = 's32[]', space=sflag, size = 0x4, offset = 0, fixed_abs, tag = 'sflag constant byte address 0x0 - dummy sync flag']
  #allocation7 [shape = 's32[]', space=sflag, size = 0x4, offset = 0, fixed_abs, tag = 'sflag constant byte address 0x0 - dummy sync flag']
  #allocation9 [shape = 's32[]', space=sflag, size = 0x4, offset = 0, fixed_abs, tag = 'sflag constant byte address 0x0 - dummy sync flag']
  %s0 = inlined_call_operand.hbm [shape: f32[4,512], index: 0, kind: input, shape index: {}]
  %s1 = inlined_call_operand.hbm [shape: f32[4,512], index: 1, kind: output, shape index: {}]
  %s2 = sld [smem:[#allocation0]]
  $region2: #{tpu_custom_call.1} parent=0
    _
  %s4 = ssub.s32 1, %s2
  %s5 = scalar_select 0, %s4, %s2
  $region1: #{tpu_custom_call.1} parent=0
    #allocation4 [shape = 'u32[3]{0}', space=smem, size = 0xc, scoped, tag = 'DMA stride descriptor']
    #allocation6 [shape = 'u32[3]{0}', space=smem, size = 0xc, scoped, tag = 'DMA stride descriptor']
    #allocation8 [shape = 'u32[3]{0}', space=smem, size = 0xc, scoped, tag = 'DMA stride descriptor']
    #allocation10 [shape = 'u32[3]{0}', space=smem, size = 0xc, scoped, tag = 'DMA stride descriptor']
    %s7 = sshll.u32 1, 14
    %s8 = sxor.u32 4294967295, %s7
    %s11 = sshll.u32 3, 24
    %s12 = sxor.u32 4294967295, %s11
    %s13 = sand.u32 0, %s12
    %s15 = sor.u32 %s13, 0
    %18 = sst [smem:[#allocation4]] 64
    %s19 = scalar_lea.smem [#allocation4], 1
    %20 = sst [smem:[%s19]] 64
    %s21 = scalar_lea.smem [#allocation4], 2
    %22 = sst [smem:[%s21]] 1
    %24 = dma.general %s0, 64, %s1, [#allocation2], [#allocation3], [#allocation4], %s15, 0
    %s25 = scalar_lea.hbm %s0, 16
    %s26 = scalar_lea.hbm %s1, 16
    %s27 = scalar_lea.sflag [#allocation2], 1
    %s29 = sshll.u32 1, 14
    %s30 = sxor.u32 4294967295, %s29
    %s33 = sshll.u32 3, 24
    %s34 = sxor.u32 4294967295, %s33
    %s35 = sand.u32 0, %s34
    %s37 = sor.u32 %s35, 0
    %40 = sst [smem:[#allocation6]] 64
    %s41 = scalar_lea.smem [#allocation6], 1
    %42 = sst [smem:[%s41]] 64
    %s43 = scalar_lea.smem [#allocation6], 2
    %44 = sst [smem:[%s43]] 1
    %46 = dma.general %s25, 64, %s26, %s27, [#allocation5], [#allocation6], %s37, 0
    %s47 = scalar_lea.hbm %s0, 32
    %s48 = scalar_lea.hbm %s1, 32
    %s49 = scalar_lea.sflag [#allocation2], 2
    %s51 = sshll.u32 1, 14
    %s52 = sxor.u32 4294967295, %s51
    %s55 = sshll.u32 3, 24
    %s56 = sxor.u32 4294967295, %s55
    %s57 = sand.u32 0, %s56
    %s59 = sor.u32 %s57, 0
    %62 = sst [smem:[#allocation8]] 64
    %s63 = scalar_lea.smem [#allocation8], 1
    %64 = sst [smem:[%s63]] 64
    %s65 = scalar_lea.smem [#allocation8], 2
    %66 = sst [smem:[%s65]] 1
    %68 = dma.general %s47, 64, %s48, %s49, [#allocation7], [#allocation8], %s59, 0
    %s69 = scalar_lea.hbm %s0, 48
    %s70 = scalar_lea.hbm %s1, 48
    %s71 = scalar_lea.sflag [#allocation2], 3
    %s73 = sshll.u32 1, 14
    %s74 = sxor.u32 4294967295, %s73
    %s77 = sshll.u32 3, 24
    %s78 = sxor.u32 4294967295, %s77
    %s79 = sand.u32 0, %s78
    %s81 = sor.u32 %s79, 0
    %84 = sst [smem:[#allocation10]] 64
    %s85 = scalar_lea.smem [#allocation10], 1
    %86 = sst [smem:[%s85]] 64
    %s87 = scalar_lea.smem [#allocation10], 2
    %88 = sst [smem:[%s87]] 1
    %90 = dma.general %s69, 64, %s70, %s71, [#allocation9], [#allocation10], %s81, 0
    %92 = dma.done [#allocation2], 64
    %94 = dma.done %s27, 64
    %96 = dma.done %s49, 64
    %98 = dma.done %s71, 64
  %99 = vsyncmov [#allocation2]
  %s100 = vpop.sfrf %99
  %p101 = scmp.eq.s32.totalorder %s100, 0
  %p102 = pneg %p101
  %104 = shalt.err (%p102)
  %s105 = scalar_lea.sflag [#allocation2], 1
  %106 = vsyncmov %s105
  %s107 = vpop.sfrf %106
  %p108 = scmp.eq.s32.totalorder %s107, 0
  %p109 = pneg %p108
  %111 = shalt.err (%p109)
  %s112 = scalar_lea.sflag [#allocation2], 2
  %113 = vsyncmov %s112
  %s114 = vpop.sfrf %113
  %p115 = scmp.eq.s32.totalorder %s114, 0
  %p116 = pneg %p115
  %118 = shalt.err (%p116)
  %s119 = scalar_lea.sflag [#allocation2], 3
  %120 = vsyncmov %s119
  %s121 = vpop.sfrf %120
  %p122 = scmp.eq.s32.totalorder %s121, 0
  %p123 = pneg %p122
  %125 = shalt.err (%p123)

</llo_original>
